<compile_context>
chip_gen: v7x
topology: tpu7x:2x2x1
jax: 0.10.0
libtpu: 0.0.40
codegen_flags: <defaults>
</compile_context>

<pallas_src>
import functools

import jax
import jax.numpy as jnp
from jax import lax
from jax.experimental import pallas as pl
from jax.experimental.pallas import tpu as pltpu


def _cross_att_kernel(cross_ref, mdown_ref, wgt_ref, bgt_ref, wp_ref, bp_ref,
                      ww_ref, bw_ref, o_ref, *, ci):
    # cross_ref: (1, Cin, Sc)  cross_feature, spatial flattened into lanes
    # mdown_ref: (1, Cin, Sc)  main_feature pre-downsampled to cross resolution
    # wgt/bgt:   (2*Ci, Cin) / (2*Ci, 1)   concatenated [g; theta] 1x1 convs
    # wp/bp:     (Ci, Cin)   / (Ci, 1)     phi 1x1 conv
    # ww/bw:     (Cin, Ci)   / (Cin, 1)    W 1x1 conv with eval BatchNorm folded
    # o_ref:     (1, Cin, Sc)  output at cross resolution (pre-upsample/residual)
    f32 = jnp.float32
    x = cross_ref[0].astype(f32)                                            # (Cin, Sc)
    zd = mdown_ref[0].astype(f32)                                           # (Cin, Sc)

    # g and theta in a single channel matmul; phi on the downsampled main.
    # TODO(synk): bf16 MXU inputs (~4x throughput) not used -- exceeds the f32
    # reference tolerance; enable only if inference precision allows.
    gt = jnp.dot(wgt_ref[...], x, preferred_element_type=f32) + bgt_ref[...]    # (2Ci, Sc)
    g = gt[:ci, :]                                                          # (Ci, Sc)
    th = gt[ci:, :]                                                         # (Ci, Sc)
    ph = jnp.dot(wp_ref[...], zd, preferred_element_type=f32) + bp_ref[...]     # (Ci, Sc)

    # Scores in transposed form: fT[s2, s1] = sum_c theta[c, s2] * g[c, s1].
    # Transposes stay confined to the small (Ci, Sc) operands; the big (Sc, Sc)
    # matrix is later consumed in canonical (K, N) form (no XLU transpose).
    fT = lax.dot_general(th, g, (((0,), (0,)), ((), ())),
                         preferred_element_type=f32)                        # (Sc, Sc)

    # Softmax over s2 (axis 0 of fT). Normalize with a reciprocal of the
    # (1, Sc) sum + one vmul per element instead of a full-matrix divide.
    fT = fT - jnp.max(fT, axis=0, keepdims=True)
    e = jnp.exp(fT)
    inv = pl.reciprocal(jnp.sum(e, axis=0, keepdims=True), approx=False)    # (1, Sc)
    pT = e * inv                                                            # (Sc, Sc)

    # attn[c, s1] = sum_{s2} ph[c, s2] * pT[s2, s1]  -- canonical (Ci,K)@(K,Sc)
    attn = jnp.dot(ph, pT, preferred_element_type=f32)                      # (Ci, Sc)

    # W 1x1 conv (Ci -> Cin) with eval-mode BatchNorm folded in.
    w_out = jnp.dot(ww_ref[...], attn, preferred_element_type=f32) + bw_ref[...]  # (Cin, Sc)
    o_ref[0] = w_out.astype(o_ref.dtype)


def _nearest_resize_nchw(x, out_h, out_w):
    """Exact PyTorch F.interpolate(mode='nearest'): dst (i, j) <- src
    (floor(i*H/out_h), floor(j*W/out_w)). Integer ratios become a strided
    slice (down) or repeat (up); otherwise a gather."""
    _, _, H, W = x.shape
    if H == out_h and W == out_w:
        return x
    if out_h <= H and H % out_h == 0 and out_w <= W and W % out_w == 0:
        return x[:, :, :: H // out_h, :: W // out_w]
    if out_h >= H and out_h % H == 0 and out_w >= W and out_w % W == 0:
        return jnp.repeat(jnp.repeat(x, out_h // H, axis=2), out_w // W, axis=3)
    hi = (jnp.arange(out_h) * H) // out_h
    wi = (jnp.arange(out_w) * W) // out_w
    return jnp.take(jnp.take(x, hi, axis=2), wi, axis=3)


def cross_att_pallas(main_feature, cross_feature, params, eps=1e-5):
    """main_feature: (B, Cin, Hm, Wm); cross_feature: (B, Cin, Hc, Wc).
    params: PyTorch-shaped weights (O, I, 1, 1), biases (O,), BN gamma/beta/mean/var."""
    B, Cin, Hm, Wm = main_feature.shape
    _, _, Hc, Wc = cross_feature.shape
    Ci = params["wg"].shape[0]
    # The PyTorch module interpolates to scalar (square) sizes and its
    # view/matmul chain requires square spatial inputs.
    assert Hm == Wm and Hc == Wc, "CrossAtt requires square spatial inputs"
    Sc = Hc * Wc
    out_dtype = main_feature.dtype
    f32 = jnp.float32

    # NCHW with spatial flattened is already (channel rows, spatial lanes).
    cross_flat = cross_feature.reshape(B, Cin, Sc)
    # Nearest-downsample of main to the cross resolution: strided slice in the
    # wrapper (exact, effectively free) replaces the old one-hot matmul.
    mdown_flat = _nearest_resize_nchw(main_feature, Hc, Wc).reshape(B, Cin, Sc)

    # g and theta concatenated into one (2*Ci, Cin) weight / (2*Ci, 1) bias.
    w_gt = jnp.concatenate(
        [params["wg"][:, :, 0, 0], params["wt"][:, :, 0, 0]], axis=0).astype(f32)
    b_gt = jnp.concatenate(
        [params["bg"], params["bt"]], axis=0).reshape(2 * Ci, 1).astype(f32)
    wp = params["wp"][:, :, 0, 0].astype(f32)
    bp = params["bp"].reshape(Ci, 1).astype(f32)

    # Fold eval-mode BatchNorm into the W 1x1 conv.
    # TODO(synk): training-mode (batch-statistic) BatchNorm is not implemented.
    scale = params["gamma"] / jnp.sqrt(params["var"] + eps)                 # (Cin,)
    ww = (scale[:, None] * params["wW"][:, :, 0, 0]).astype(f32)            # (Cin, Ci)
    bw = (scale * (params["bW"] - params["mean"]) + params["beta"])
    bw = bw.reshape(Cin, 1).astype(f32)

    kernel = functools.partial(_cross_att_kernel, ci=Ci)
    w_out_flat = pl.pallas_call(
        kernel,
        out_shape=jax.ShapeDtypeStruct((B, Cin, Sc), out_dtype),
        grid_spec=pltpu.PrefetchScalarGridSpec(
            num_scalar_prefetch=0,
            grid=(B,),
            in_specs=[
                pl.BlockSpec((1, Cin, Sc), lambda b: (b, 0, 0)),   # cross_feature
                pl.BlockSpec((1, Cin, Sc), lambda b: (b, 0, 0)),   # downsampled main
                pl.BlockSpec((2 * Ci, Cin), lambda b: (0, 0)),     # [g; theta] weight
                pl.BlockSpec((2 * Ci, 1), lambda b: (0, 0)),       # [g; theta] bias
                pl.BlockSpec((Ci, Cin), lambda b: (0, 0)),         # phi weight
                pl.BlockSpec((Ci, 1), lambda b: (0, 0)),           # phi bias
                pl.BlockSpec((Cin, Ci), lambda b: (0, 0)),         # W weight (BN folded)
                pl.BlockSpec((Cin, 1), lambda b: (0, 0)),          # W bias (BN folded)
            ],
            out_specs=pl.BlockSpec((1, Cin, Sc), lambda b: (b, 0, 0)),
        ),
        compiler_params=pltpu.CompilerParams(
            dimension_semantics=("parallel",),        # batch shards across v7x's 2 TCs
            vmem_limit_bytes=32 * 1024 * 1024,
        ),
    )(cross_flat, mdown_flat, w_gt, b_gt, wp, bp, ww, bw)

    # Nearest-upsample back to main resolution + residual add: a pure
    # repeat/gather fused by XLA -- cheaper than a 99.9%-sparse one-hot matmul
    # (and removes the old 16 MiB resident u_mat at realistic sizes).
    w_out = w_out_flat.reshape(B, Cin, Hc, Wc)
    return _nearest_resize_nchw(w_out, Hm, Wm) + main_feature


def _reference(main, cross, params, eps=1e-5):
    """Plain-JAX reference mirroring the PyTorch CrossAtt forward (BN in eval mode)."""
    B, Cin, Hm, Wm = main.shape
    _, _, Hc, Wc = cross.shape
    Ci = params["wg"].shape[0]

    def conv1x1(x, w, b):
        y = jnp.einsum("oi,bihw->bohw", w[:, :, 0, 0], x)
        return y + b.reshape(1, -1, 1, 1)

    def nearest(x, size):
        _, _, H, W = x.shape
        hi = (jnp.arange(size) * H) // size
        wi = (jnp.arange(size) * W) // size
        return jnp.take(jnp.take(x, hi, axis=2), wi, axis=3)

    x = conv1x1(cross, params["wg"], params["bg"]).reshape(B, Ci, -1)
    x = jnp.transpose(x, (0, 2, 1))                                         # (B, Sc, Ci)
    y = conv1x1(cross, params["wt"], params["bt"]).reshape(B, Ci, -1)       # (B, Ci, Sc)
    z = conv1x1(nearest(main, Hc), params["wp"], params["bp"]).reshape(B, Ci, -1)
    z = jnp.transpose(z, (0, 2, 1))                                         # (B, Sc, Ci)
    f = jnp.einsum("bsc,bct->bst", x, y)
    p = jax.nn.softmax(f, axis=-1)
    out = jnp.einsum("bst,btc->bsc", p, z)
    out = jnp.transpose(out, (0, 2, 1)).reshape(B, Ci, Hc, Wc)
    out = conv1x1(out, params["wW"], params["bW"])
    scale = (params["gamma"] / jnp.sqrt(params["var"] + eps)).reshape(1, -1, 1, 1)
    shift = (params["beta"] - params["mean"] * params["gamma"]
             / jnp.sqrt(params["var"] + eps)).reshape(1, -1, 1, 1)
    out = out * scale + shift
    out = nearest(out, Hm)
    return out + main


if __name__ == "__main__":
    B, Cin, Hm, Hc = 2, 4, 16, 8
    Ci = Cin // 2          # inter_channels = in_channels // 2

    keys = jax.random.split(jax.random.PRNGKey(0), 14)
    main = jax.random.normal(keys[0], (B, Cin, Hm, Hm), jnp.float32)
    cross = jax.random.normal(keys[1], (B, Cin, Hc, Hc), jnp.float32)
    params = {
        "wg": 0.2 * jax.random.normal(keys[2], (Ci, Cin, 1, 1), jnp.float32),
        "bg": 0.1 * jax.random.normal(keys[3], (Ci,), jnp.float32),
        "wt": 0.2 * jax.random.normal(keys[4], (Ci, Cin, 1, 1), jnp.float32),
        "bt": 0.1 * jax.random.normal(keys[5], (Ci,), jnp.float32),
        "wp": 0.2 * jax.random.normal(keys[6], (Ci, Cin, 1, 1), jnp.float32),
        "bp": 0.1 * jax.random.normal(keys[7], (Ci,), jnp.float32),
        "wW": 0.2 * jax.random.normal(keys[8], (Cin, Ci, 1, 1), jnp.float32),
        "bW": 0.1 * jax.random.normal(keys[9], (Cin,), jnp.float32),
        # NOTE: the PyTorch module initializes BN gamma/beta to 0 (W(...) == 0 at
        # init); non-trivial BN parameters are used here so the test exercises the
        # whole attention + W + upsample path.
        "gamma": 1.0 + 0.1 * jax.random.normal(keys[10], (Cin,), jnp.float32),
        "beta": 0.1 * jax.random.normal(keys[11], (Cin,), jnp.float32),
        "mean": 0.1 * jax.random.normal(keys[12], (Cin,), jnp.float32),
        "var": 1.0 + 0.5 * jax.random.uniform(keys[13], (Cin,), jnp.float32),
    }

    out = jax.block_until_ready(cross_att_pallas(main, cross, params))
    ref = jax.block_until_ready(_reference(main, cross, params))

    assert out.shape == (B, Cin, Hm, Hm), out.shape
    max_err = float(jnp.max(jnp.abs(out - ref)))
    assert jnp.allclose(out, ref, atol=1e-4, rtol=1e-4), max_err
    print("KERNEL_OK")
</pallas_src>

<mosaic_0001>
module attributes {stable_mosaic.version = 11 : i64} {
  func.func @_cross_att_kernel(%arg0: i32, %arg1: memref<1x4x64xf32, #tpu.memory_space<vmem>>, %arg2: memref<1x4x64xf32, #tpu.memory_space<vmem>>, %arg3: memref<4x4xf32, #tpu.memory_space<vmem>>, %arg4: memref<4x1xf32, #tpu.memory_space<vmem>>, %arg5: memref<2x4xf32, #tpu.memory_space<vmem>>, %arg6: memref<2x1xf32, #tpu.memory_space<vmem>>, %arg7: memref<4x2xf32, #tpu.memory_space<vmem>>, %arg8: memref<4x1xf32, #tpu.memory_space<vmem>>, %arg9: memref<1x4x64xf32, #tpu.memory_space<vmem>>) attributes {dimension_semantics = [#tpu.dimension_semantics<parallel>], iteration_bounds = array<i64: 2>, scalar_prefetch = 0 : i64, scratch_operands = 0 : i64, tpu.core_type = #tpu.core_type<tc>, window_params = [{transform_indices = @transform_0, window_bounds = array<i64: 1, 4, 64>}, {transform_indices = @transform_1, window_bounds = array<i64: 1, 4, 64>}, {pipeline_mode = #tpu.pipeline_mode<synchronous>, transform_indices = @transform_2, window_bounds = array<i64: 4, 4>}, {pipeline_mode = #tpu.pipeline_mode<synchronous>, transform_indices = @transform_3, window_bounds = array<i64: 4, 1>}, {pipeline_mode = #tpu.pipeline_mode<synchronous>, transform_indices = @transform_4, window_bounds = array<i64: 2, 4>}, {pipeline_mode = #tpu.pipeline_mode<synchronous>, transform_indices = @transform_5, window_bounds = array<i64: 2, 1>}, {pipeline_mode = #tpu.pipeline_mode<synchronous>, transform_indices = @transform_6, window_bounds = array<i64: 4, 2>}, {pipeline_mode = #tpu.pipeline_mode<synchronous>, transform_indices = @transform_7, window_bounds = array<i64: 4, 1>}, {transform_indices = @transform_8, window_bounds = array<i64: 1, 4, 64>}]} {
    %c0 = arith.constant 0 : index
    %c0_0 = arith.constant 0 : index
    %c0_1 = arith.constant 0 : index
    %0 = vector.load %arg1[%c0, %c0_0, %c0_1] : memref<1x4x64xf32, #tpu.memory_space<vmem>>, vector<1x4x64xf32>
    %1 = vector.shape_cast %0 : vector<1x4x64xf32> to vector<4x64xf32>
    %c0_2 = arith.constant 0 : index
    %c0_3 = arith.constant 0 : index
    %c0_4 = arith.constant 0 : index
    %2 = vector.load %arg2[%c0_2, %c0_3, %c0_4] : memref<1x4x64xf32, #tpu.memory_space<vmem>>, vector<1x4x64xf32>
    %3 = vector.shape_cast %2 : vector<1x4x64xf32> to vector<4x64xf32>
    %c0_5 = arith.constant 0 : index
    %c0_6 = arith.constant 0 : index
    %4 = vector.load %arg3[%c0_5, %c0_6] : memref<4x4xf32, #tpu.memory_space<vmem>>, vector<4x4xf32>
    %cst = arith.constant dense<0.000000e+00> : vector<4x64xf32>
    %5 = tpu.matmul %4, %1, %cst {dimension_numbers = #tpu.dot_dimension_numbers<[1], [0], [0], [1], [0, 0, 1, 1], [], []>} : vector<4x4xf32>, vector<4x64xf32>, vector<4x64xf32> -> vector<4x64xf32>
    %c0_7 = arith.constant 0 : index
    %c0_8 = arith.constant 0 : index
    %6 = vector.load %arg4[%c0_7, %c0_8] : memref<4x1xf32, #tpu.memory_space<vmem>>, vector<4x1xf32>
    %7 = vector.broadcast %6 : vector<4x1xf32> to vector<4x64xf32>
    %8 = arith.addf %5, %7 : vector<4x64xf32>
    %9 = vector.extract_strided_slice %8 {offsets = [0, 0], sizes = [2, 64], strides = [1, 1]} : vector<4x64xf32> to vector<2x64xf32>
    %10 = vector.extract_strided_slice %8 {offsets = [2, 0], sizes = [2, 64], strides = [1, 1]} : vector<4x64xf32> to vector<2x64xf32>
    %c0_9 = arith.constant 0 : index
    %c0_10 = arith.constant 0 : index
    %11 = vector.load %arg5[%c0_9, %c0_10] : memref<2x4xf32, #tpu.memory_space<vmem>>, vector<2x4xf32>
    %cst_11 = arith.constant dense<0.000000e+00> : vector<2x64xf32>
    %12 = tpu.matmul %11, %3, %cst_11 {dimension_numbers = #tpu.dot_dimension_numbers<[1], [0], [0], [1], [0, 0, 1, 1], [], []>} : vector<2x4xf32>, vector<4x64xf32>, vector<2x64xf32> -> vector<2x64xf32>
    %c0_12 = arith.constant 0 : index
    %c0_13 = arith.constant 0 : index
    %13 = vector.load %arg6[%c0_12, %c0_13] : memref<2x1xf32, #tpu.memory_space<vmem>>, vector<2x1xf32>
    %14 = vector.broadcast %13 : vector<2x1xf32> to vector<2x64xf32>
    %15 = arith.addf %12, %14 : vector<2x64xf32>
    %cst_14 = arith.constant dense<0.000000e+00> : vector<64x64xf32>
    %16 = tpu.matmul %10, %9, %cst_14 {dimension_numbers = #tpu.dot_dimension_numbers<[0], [0], [1], [1], [0, 1, 1, 1], [], []>} : vector<2x64xf32>, vector<2x64xf32>, vector<64x64xf32> -> vector<64x64xf32>
    %cst_15 = arith.constant dense<0xFF800000> : vector<64xf32>
    %17 = vector.multi_reduction <maximumf>, %16, %cst_15 [0] : vector<64x64xf32> to vector<64xf32>
    %18 = vector.shape_cast %17 : vector<64xf32> to vector<1x64xf32>
    %19 = vector.broadcast %18 : vector<1x64xf32> to vector<64x64xf32>
    %20 = arith.subf %16, %19 : vector<64x64xf32>
    %21 = math.exp %20 : vector<64x64xf32>
    %cst_16 = arith.constant dense<0.000000e+00> : vector<64xf32>
    %22 = vector.multi_reduction <add>, %21, %cst_16 [0] : vector<64x64xf32> to vector<64xf32>
    %23 = vector.shape_cast %22 : vector<64xf32> to vector<1x64xf32>
    %24 = tpu.reciprocal %23 : vector<1x64xf32> -> vector<1x64xf32>
    %25 = vector.broadcast %24 : vector<1x64xf32> to vector<64x64xf32>
    %26 = arith.mulf %21, %25 : vector<64x64xf32>
    %cst_17 = arith.constant dense<0.000000e+00> : vector<2x64xf32>
    %27 = tpu.matmul %15, %26, %cst_17 {dimension_numbers = #tpu.dot_dimension_numbers<[1], [0], [0], [1], [0, 0, 1, 1], [], []>} : vector<2x64xf32>, vector<64x64xf32>, vector<2x64xf32> -> vector<2x64xf32>
    %c0_18 = arith.constant 0 : index
    %c0_19 = arith.constant 0 : index
    %28 = vector.load %arg7[%c0_18, %c0_19] : memref<4x2xf32, #tpu.memory_space<vmem>>, vector<4x2xf32>
    %cst_20 = arith.constant dense<0.000000e+00> : vector<4x64xf32>
    %29 = tpu.matmul %28, %27, %cst_20 {dimension_numbers = #tpu.dot_dimension_numbers<[1], [0], [0], [1], [0, 0, 1, 1], [], []>} : vector<4x2xf32>, vector<2x64xf32>, vector<4x64xf32> -> vector<4x64xf32>
    %c0_21 = arith.constant 0 : index
    %c0_22 = arith.constant 0 : index
    %30 = vector.load %arg8[%c0_21, %c0_22] : memref<4x1xf32, #tpu.memory_space<vmem>>, vector<4x1xf32>
    %31 = vector.broadcast %30 : vector<4x1xf32> to vector<4x64xf32>
    %32 = arith.addf %29, %31 : vector<4x64xf32>
    %c0_23 = arith.constant 0 : index
    %c0_24 = arith.constant 0 : index
    %c0_25 = arith.constant 0 : index
    %33 = vector.load %arg9[%c0_23, %c0_24, %c0_25] : memref<1x4x64xf32, #tpu.memory_space<vmem>>, vector<1x4x64xf32>
    %34 = vector.shape_cast %33 : vector<1x4x64xf32> to vector<4x64xf32>
    %35 = vector.shape_cast %32 : vector<4x64xf32> to vector<1x4x64xf32>
    tpu.vector_store %arg9[%c0_23, %c0_24, %c0_25], %35 {strides = array<i32>} : memref<1x4x64xf32, #tpu.memory_space<vmem>>, vector<1x4x64xf32>,
    return
  }
  func.func @transform_0(%arg0: i32) -> (i32, i32, i32) {
    %c0_i32 = arith.constant 0 : i32
    %c0_i32_0 = arith.constant 0 : i32
    %c0_i32_1 = arith.constant 0 : i32
    return %arg0, %c0_i32, %c0_i32_0 : i32, i32, i32
  }
  func.func @transform_1(%arg0: i32) -> (i32, i32, i32) {
    %c0_i32 = arith.constant 0 : i32
    %c0_i32_0 = arith.constant 0 : i32
    %c0_i32_1 = arith.constant 0 : i32
    return %arg0, %c0_i32, %c0_i32_0 : i32, i32, i32
  }
  func.func @transform_2(%arg0: i32) -> (i32, i32) {
    %c0_i32 = arith.constant 0 : i32
    %c0_i32_0 = arith.constant 0 : i32
    %c0_i32_1 = arith.constant 0 : i32
    return %c0_i32, %c0_i32_0 : i32, i32
  }
  func.func @transform_3(%arg0: i32) -> (i32, i32) {
    %c0_i32 = arith.constant 0 : i32
    %c0_i32_0 = arith.constant 0 : i32
    %c0_i32_1 = arith.constant 0 : i32
    return %c0_i32, %c0_i32_0 : i32, i32
  }
  func.func @transform_4(%arg0: i32) -> (i32, i32) {
    %c0_i32 = arith.constant 0 : i32
    %c0_i32_0 = arith.constant 0 : i32
    %c0_i32_1 = arith.constant 0 : i32
    return %c0_i32, %c0_i32_0 : i32, i32
  }
  func.func @transform_5(%arg0: i32) -> (i32, i32) {
    %c0_i32 = arith.constant 0 : i32
    %c0_i32_0 = arith.constant 0 : i32
    %c0_i32_1 = arith.constant 0 : i32
    return %c0_i32, %c0_i32_0 : i32, i32
  }
  func.func @transform_6(%arg0: i32) -> (i32, i32) {
    %c0_i32 = arith.constant 0 : i32
    %c0_i32_0 = arith.constant 0 : i32
    %c0_i32_1 = arith.constant 0 : i32
    return %c0_i32, %c0_i32_0 : i32, i32
  }
  func.func @transform_7(%arg0: i32) -> (i32, i32) {
    %c0_i32 = arith.constant 0 : i32
    %c0_i32_0 = arith.constant 0 : i32
    %c0_i32_1 = arith.constant 0 : i32
    return %c0_i32, %c0_i32_0 : i32, i32
  }
  func.func @transform_8(%arg0: i32) -> (i32, i32, i32) {
    %c0_i32 = arith.constant 0 : i32
    %c0_i32_0 = arith.constant 0 : i32
    %c0_i32_1 = arith.constant 0 : i32
    return %arg0, %c0_i32, %c0_i32_0 : i32, i32, i32
  }
}

</mosaic_0001>

<llo_original>
// kernel: tpu_custom_call.1
$region0: #{tpu_custom_call.1}
  #allocation0 [shape = 'u32[]', space=smem, size = 0x4, offset = 0x4, fixed_abs, tag = 'smem constant byte address 0x4 - core index']
  #allocation1 [shape = 'u32[144,128]{1,0:T(1,128)}', space=vmem, size = 0x12000, scoped, tag = 'internal scratch']
  %s0 = inlined_call_operand.vmem [shape: f32[2,4,64], index: 0, kind: input, shape index: {}]
  %s1 = inlined_call_operand.vmem [shape: f32[2,4,64], index: 1, kind: input, shape index: {}]
  %s2 = inlined_call_operand.vmem [shape: f32[4,4], index: 2, kind: input, shape index: {}]
  %s3 = inlined_call_operand.vmem [shape: f32[4,1], index: 3, kind: input, shape index: {}]
  %s4 = inlined_call_operand.vmem [shape: f32[2,4], index: 4, kind: input, shape index: {}]
  %s5 = inlined_call_operand.vmem [shape: f32[2,1], index: 5, kind: input, shape index: {}]
  %s6 = inlined_call_operand.vmem [shape: f32[4,2], index: 6, kind: input, shape index: {}]
  %s7 = inlined_call_operand.vmem [shape: f32[4,1], index: 7, kind: input, shape index: {}]
  %s8 = inlined_call_operand.hbm [shape: f32[2,4,64], index: 8, kind: output, shape index: {}]
  %s9 = sld [smem:[#allocation0]]
  $region65: #{tpu_custom_call.1} parent=0
    _
  %s11 = ssub.s32 1, %s9
  %s12 = scalar_select 0, %s11, %s9
  $region1: #{tpu_custom_call.1} parent=0
    #allocation2 [shape = 'u8[4096]{0}', space=vmem, size = 0x1000, scoped, tag = 'output window, operand 0']
    #allocation3 [shape = 's32[2]{0}', space=sflag, size = 0x8, scoped, tag = 'scoped memory for tpu_custom_call.1']
    %13 = vsyncpa [#allocation3], 0
    %s14 = scalar_lea.sflag [#allocation3], 1
    %15 = vsyncpa %s14, 0
    loop: start=0, step=1, limit=4
    $region2: #{tpu_custom_call.1} parent=1 // loop_pre_header
      _
    $region3: #{tpu_custom_call.1} parent=1 // loop_header
      %s17 = sphi 0, %s21
      %p18 = scmp.ge.s32.totalorder %s17, 4
      %s27 = sphi 0, %s29
      %s30 = sphi 0, %s27
      %s31 = sphi 0, %s30
      %s47 = sphi 0, %s31
      %s53 = sphi 0, %s55
      %s56 = sphi 0, %s53
      %s57 = sphi 0, %s56
      %s73 = sphi 0, %s57
      %s77 = sphi 0, %s77
      %s79 = sphi 0, %s77
      %s80 = sphi 0, %s79
      %s94 = sphi 0, %s80
      %s98 = sphi 0, %s98
      %s100 = sphi 0, %s98
      %s101 = sphi 0, %s100
      %s115 = sphi 0, %s101
      %s119 = sphi 0, %s119
      %s121 = sphi 0, %s119
      %s122 = sphi 0, %s121
      %s136 = sphi 0, %s122
      %s140 = sphi 0, %s140
      %s142 = sphi 0, %s140
      %s143 = sphi 0, %s142
      %s157 = sphi 0, %s143
      %s161 = sphi 0, %s161
      %s163 = sphi 0, %s161
      %s164 = sphi 0, %s163
      %s178 = sphi 0, %s164
      %s182 = sphi 0, %s182
      %s184 = sphi 0, %s182
      %s185 = sphi 0, %s184
      %s199 = sphi 0, %s185
      %s205 = sphi 0, %s207
      %s208 = sphi 0, %s205
      %s209 = sphi 0, %s208
      %s225 = sphi 0, %s209
    $region4: #{tpu_custom_call.1} parent=1 // loop_header_branch
      %20 = sbr.rel (%p18) target = $region8
    $region5: #{tpu_custom_call.1} parent=1 // loop_body
      %s22 = ssub.s32 %s17, 1
      %s23 = ssub.s32 %s17, 2
      %s24 = sadd.s32 %s17, 1
      %s25 = ssub.s32 %s17, %s24
      %p26 = scmp.eq.s32.totalorder %s25, 0
      %s28 = sadd.s32 %s27, 1
      %s29 = scalar_select %p26, %s27, %s28
      %p32 = pneg %p26
      %p33 = scmp.eq.s32.totalorder %s17, 1
      %p34 = por %p32, %p33
      %p35 = scmp.ne.s32.totalorder %s27, %s30
      %p36 = scmp.eq.s32.totalorder %s17, 0
      %p37 = por %p35, %p36
      %p38 = scmp.ne.s32.totalorder %s27, %s30
      %p39 = scmp.eq.s32.totalorder %s22, 1
      %p40 = por %p38, %p39
      %p41 = scmp.ne.s32.totalorder %s30, %s31
      %p42 = scmp.eq.s32.totalorder %s22, 0
      %p43 = por %p41, %p42
      %p44 = scmp.ne.s32.totalorder %s30, %s31
      %p45 = scmp.eq.s32.totalorder %s23, 1
      %p46 = por %p44, %p45
      %p48 = scmp.ne.s32.totalorder %s31, %s47
      %p49 = scmp.eq.s32.totalorder %s23, 0
      %p50 = por %p48, %p49
      %s51 = ssub.s32 %s17, %s24
      %p52 = scmp.eq.s32.totalorder %s51, 0
      %s54 = sadd.s32 %s53, 1
      %s55 = scalar_select %p52, %s53, %s54
      %p58 = pneg %p52
      %p59 = scmp.eq.s32.totalorder %s17, 1
      %p60 = por %p58, %p59
      %p61 = scmp.ne.s32.totalorder %s53, %s56
      %p62 = scmp.eq.s32.totalorder %s17, 0
      %p63 = por %p61, %p62
      %p64 = scmp.ne.s32.totalorder %s53, %s56
      %p65 = scmp.eq.s32.totalorder %s22, 1
      %p66 = por %p64, %p65
      %p67 = scmp.ne.s32.totalorder %s56, %s57
      %p68 = scmp.eq.s32.totalorder %s22, 0
      %p69 = por %p67, %p68
      %p70 = scmp.ne.s32.totalorder %s56, %s57
      %p71 = scmp.eq.s32.totalorder %s23, 1
      %p72 = por %p70, %p71
      %p74 = scmp.ne.s32.totalorder %s57, %s73
      %p75 = scmp.eq.s32.totalorder %s23, 0
      %p76 = por %p74, %p75
      %s78 = sadd.s32 %s77, 1
      %p81 = scmp.eq.s32.totalorder %s17, 1
      %p82 = scmp.ne.s32.totalorder %s77, %s79
      %p83 = scmp.eq.s32.totalorder %s17, 0
      %p84 = por %p82, %p83
      %p85 = scmp.ne.s32.totalorder %s77, %s79
      %p86 = scmp.eq.s32.totalorder %s22, 1
      %p87 = por %p85, %p86
      %p88 = scmp.ne.s32.totalorder %s79, %s80
      %p89 = scmp.eq.s32.totalorder %s22, 0
      %p90 = por %p88, %p89
      %p91 = scmp.ne.s32.totalorder %s79, %s80
      %p92 = scmp.eq.s32.totalorder %s23, 1
      %p93 = por %p91, %p92
      %p95 = scmp.ne.s32.totalorder %s80, %s94
      %p96 = scmp.eq.s32.totalorder %s23, 0
      %p97 = por %p95, %p96
      %s99 = sadd.s32 %s98, 1
      %p102 = scmp.eq.s32.totalorder %s17, 1
      %p103 = scmp.ne.s32.totalorder %s98, %s100
      %p104 = scmp.eq.s32.totalorder %s17, 0
      %p105 = por %p103, %p104
      %p106 = scmp.ne.s32.totalorder %s98, %s100
      %p107 = scmp.eq.s32.totalorder %s22, 1
      %p108 = por %p106, %p107
      %p109 = scmp.ne.s32.totalorder %s100, %s101
      %p110 = scmp.eq.s32.totalorder %s22, 0
      %p111 = por %p109, %p110
      %p112 = scmp.ne.s32.totalorder %s100, %s101
      %p113 = scmp.eq.s32.totalorder %s23, 1
      %p114 = por %p112, %p113
      %p116 = scmp.ne.s32.totalorder %s101, %s115
      %p117 = scmp.eq.s32.totalorder %s23, 0
      %p118 = por %p116, %p117
      %s120 = sadd.s32 %s119, 1
      %p123 = scmp.eq.s32.totalorder %s17, 1
      %p124 = scmp.ne.s32.totalorder %s119, %s121
      %p125 = scmp.eq.s32.totalorder %s17, 0
      %p126 = por %p124, %p125
      %p127 = scmp.ne.s32.totalorder %s119, %s121
      %p128 = scmp.eq.s32.totalorder %s22, 1
      %p129 = por %p127, %p128
      %p130 = scmp.ne.s32.totalorder %s121, %s122
      %p131 = scmp.eq.s32.totalorder %s22, 0
      %p132 = por %p130, %p131
      %p133 = scmp.ne.s32.totalorder %s121, %s122
      %p134 = scmp.eq.s32.totalorder %s23, 1
      %p135 = por %p133, %p134
      %p137 = scmp.ne.s32.totalorder %s122, %s136
      %p138 = scmp.eq.s32.totalorder %s23, 0
      %p139 = por %p137, %p138
      %s141 = sadd.s32 %s140, 1
      %p144 = scmp.eq.s32.totalorder %s17, 1
      %p145 = scmp.ne.s32.totalorder %s140, %s142
      %p146 = scmp.eq.s32.totalorder %s17, 0
      %p147 = por %p145, %p146
      %p148 = scmp.ne.s32.totalorder %s140, %s142
      %p149 = scmp.eq.s32.totalorder %s22, 1
      %p150 = por %p148, %p149
      %p151 = scmp.ne.s32.totalorder %s142, %s143
      %p152 = scmp.eq.s32.totalorder %s22, 0
      %p153 = por %p151, %p152
      %p154 = scmp.ne.s32.totalorder %s142, %s143
      %p155 = scmp.eq.s32.totalorder %s23, 1
      %p156 = por %p154, %p155
      %p158 = scmp.ne.s32.totalorder %s143, %s157
      %p159 = scmp.eq.s32.totalorder %s23, 0
      %p160 = por %p158, %p159
      %s162 = sadd.s32 %s161, 1
      %p165 = scmp.eq.s32.totalorder %s17, 1
      %p166 = scmp.ne.s32.totalorder %s161, %s163
      %p167 = scmp.eq.s32.totalorder %s17, 0
      %p168 = por %p166, %p167
      %p169 = scmp.ne.s32.totalorder %s161, %s163
      %p170 = scmp.eq.s32.totalorder %s22, 1
      %p171 = por %p169, %p170
      %p172 = scmp.ne.s32.totalorder %s163, %s164
      %p173 = scmp.eq.s32.totalorder %s22, 0
      %p174 = por %p172, %p173
      %p175 = scmp.ne.s32.totalorder %s163, %s164
      %p176 = scmp.eq.s32.totalorder %s23, 1
      %p177 = por %p175, %p176
      %p179 = scmp.ne.s32.totalorder %s164, %s178
      %p180 = scmp.eq.s32.totalorder %s23, 0
      %p181 = por %p179, %p180
      %s183 = sadd.s32 %s182, 1
      %p186 = scmp.eq.s32.totalorder %s17, 1
      %p187 = scmp.ne.s32.totalorder %s182, %s184
      %p188 = scmp.eq.s32.totalorder %s17, 0
      %p189 = por %p187, %p188
      %p190 = scmp.ne.s32.totalorder %s182, %s184
      %p191 = scmp.eq.s32.totalorder %s22, 1
      %p192 = por %p190, %p191
      %p193 = scmp.ne.s32.totalorder %s184, %s185
      %p194 = scmp.eq.s32.totalorder %s22, 0
      %p195 = por %p193, %p194
      %p196 = scmp.ne.s32.totalorder %s184, %s185
      %p197 = scmp.eq.s32.totalorder %s23, 1
      %p198 = por %p196, %p197
      %p200 = scmp.ne.s32.totalorder %s185, %s199
      %p201 = scmp.eq.s32.totalorder %s23, 0
      %p202 = por %p200, %p201
      %s203 = ssub.s32 %s17, %s24
      %p204 = scmp.eq.s32.totalorder %s203, 0
      %s206 = sadd.s32 %s205, 1
      %s207 = scalar_select %p204, %s205, %s206
      %p210 = pneg %p204
      %p211 = scmp.eq.s32.totalorder %s17, 1
      %p212 = por %p210, %p211
      %p213 = scmp.ne.s32.totalorder %s205, %s208
      %p214 = scmp.eq.s32.totalorder %s17, 0
      %p215 = por %p213, %p214
      %p216 = scmp.ne.s32.totalorder %s205, %s208
      %p217 = scmp.eq.s32.totalorder %s22, 1
      %p218 = por %p216, %p217
      %p219 = scmp.ne.s32.totalorder %s208, %s209
      %p220 = scmp.eq.s32.totalorder %s22, 0
      %p221 = por %p219, %p220
      %p222 = scmp.ne.s32.totalorder %s208, %s209
      %p223 = scmp.eq.s32.totalorder %s23, 1
      %p224 = por %p222, %p223
      %p226 = scmp.ne.s32.totalorder %s209, %s225
      %p227 = scmp.eq.s32.totalorder %s23, 0
      %p228 = por %p226, %p227
      %p229 = scmp.le.s32.totalorder 1, %s17
      %p230 = scmp.lt.s32.totalorder %s17, 3
      %p231 = pnand %p229, %p230
      %p232 = pneg %p231
      // Predicated region
      $region9: #{tpu_custom_call.1} parent=5 // pred_check
        _
      $region10: #{tpu_custom_call.1} parent=5 // pred_check_branch
        %234 = sbr.rel (%p231) target = $region12
      $region11: #{tpu_custom_call.1} parent=5 // pred_region
        %s235 = ssub.s32 %s17, 1
        // Predicated region
        $region13: #{tpu_custom_call.1} parent=11 // pred_check
          %p236 = pneg %p90
        $region14: #{tpu_custom_call.1} parent=11 // pred_check_branch
          %238 = sbr.rel (%p236) target = $region16
        $region15: #{tpu_custom_call.1} parent=11 // pred_region
          _
        $region16: #{tpu_custom_call.1} parent=11 // pred_fallthru
          _
        // Predicated region
        $region17: #{tpu_custom_call.1} parent=11 // pred_check
          %p239 = pneg %p111
        $region18: #{tpu_custom_call.1} parent=11 // pred_check_branch
          %241 = sbr.rel (%p239) target = $region20
        $region19: #{tpu_custom_call.1} parent=11 // pred_region
          _
        $region20: #{tpu_custom_call.1} parent=11 // pred_fallthru
          _
        // Predicated region
        $region21: #{tpu_custom_call.1} parent=11 // pred_check
          %p242 = pneg %p132
        $region22: #{tpu_custom_call.1} parent=11 // pred_check_branch
          %244 = sbr.rel (%p242) target = $region24
        $region23: #{tpu_custom_call.1} parent=11 // pred_region
          _
        $region24: #{tpu_custom_call.1} parent=11 // pred_fallthru
          _
        // Predicated region
        $region25: #{tpu_custom_call.1} parent=11 // pred_check
          %p245 = pneg %p153
        $region26: #{tpu_custom_call.1} parent=11 // pred_check_branch
          %247 = sbr.rel (%p245) target = $region28
        $region27: #{tpu_custom_call.1} parent=11 // pred_region
          _
        $region28: #{tpu_custom_call.1} parent=11 // pred_fallthru
          _
        // Predicated region
        $region29: #{tpu_custom_call.1} parent=11 // pred_check
          %p248 = pneg %p174
        $region30: #{tpu_custom_call.1} parent=11 // pred_check_branch
          %250 = sbr.rel (%p248) target = $region32
        $region31: #{tpu_custom_call.1} parent=11 // pred_region
          _
        $region32: #{tpu_custom_call.1} parent=11 // pred_fallthru
          _
        // Predicated region
        $region33: #{tpu_custom_call.1} parent=11 // pred_check
          %p251 = pneg %p195
        $region34: #{tpu_custom_call.1} parent=11 // pred_check_branch
          %253 = sbr.rel (%p251) target = $region36
        $region35: #{tpu_custom_call.1} parent=11 // pred_region
          _
        $region36: #{tpu_custom_call.1} parent=11 // pred_fallthru
          _
      $region12: #{tpu_custom_call.1} parent=5 // pred_fallthru
        _
      %p254 = scmp.lt.s32.totalorder %s17, 2
      // Predicated region
      $region37: #{tpu_custom_call.1} parent=5 // pred_check
        %p255 = pneg %p254
      $region38: #{tpu_custom_call.1} parent=5 // pred_check_branch
        %257 = sbr.rel (%p255) target = $region40
      $region39: #{tpu_custom_call.1} parent=5 // pred_region
        // Predicated region
        $region41: #{tpu_custom_call.1} parent=39 // pred_check
          %p258 = pneg %p37
        $region42: #{tpu_custom_call.1} parent=39 // pred_check_branch
          %260 = sbr.rel (%p258) target = $region44
        $region43: #{tpu_custom_call.1} parent=39 // pred_region
          %p261 = scmp.lt.s32.totalorder %s17, 1
          %s262 = scalar_select %p261, %s17, 1
          %s263 = smul.addr %s262, 4
          %s264 = scalar_lea.vmem %s0, %s263
        $region44: #{tpu_custom_call.1} parent=39 // pred_fallthru
          _
        // Predicated region
        $region45: #{tpu_custom_call.1} parent=39 // pred_check
          %p265 = pneg %p63
        $region46: #{tpu_custom_call.1} parent=39 // pred_check_branch
          %267 = sbr.rel (%p265) target = $region48
        $region47: #{tpu_custom_call.1} parent=39 // pred_region
          %p268 = scmp.lt.s32.totalorder %s17, 1
          %s269 = scalar_select %p268, %s17, 1
          %s270 = smul.addr %s269, 4
          %s271 = scalar_lea.vmem %s1, %s270
        $region48: #{tpu_custom_call.1} parent=39 // pred_fallthru
          _
      $region40: #{tpu_custom_call.1} parent=5 // pred_fallthru
        _
      %p272 = scmp.le.s32.totalorder 1, %s17
      %p273 = scmp.lt.s32.totalorder %s17, 3
      %p274 = pnand %p272, %p273
      %p275 = pneg %p274
      // Predicated region
      $region49: #{tpu_custom_call.1} parent=5 // pred_check
        _
      $region50: #{tpu_custom_call.1} parent=5 // pred_check_branch
        %277 = sbr.rel (%p274) target = $region52
      $region51: #{tpu_custom_call.1} parent=5 // pred_region
        %s278 = ssub.s32 %s17, 1
        %p279 = scmp.lt.s32.totalorder %s22, 1
        %s280 = scalar_select %p279, %s22, 1
        %s281 = smul.addr %s280, 4
        %s282 = scalar_lea.vmem %s0, %s281
        %p283 = pneg %p43
        %p284 = pneg %p40
        %p285 = scmp.lt.s32.totalorder %s22, 1
        %s286 = scalar_select %p285, %s22, 1
        %s287 = smul.addr %s286, 4
        %s288 = scalar_lea.vmem %s1, %s287
        %p289 = pneg %p69
        %p290 = pneg %p66
        %p291 = pneg %p90
        %p292 = pneg %p87
        %p293 = pneg %p111
        %p294 = pneg %p108
        %p295 = pneg %p132
        %p296 = pneg %p129
        %p297 = pneg %p153
        %p298 = pneg %p150
        %p299 = pneg %p174
        %p300 = pneg %p171
        %p301 = pneg %p195
        %p302 = pneg %p192
        %p303 = pneg %p221
        %p304 = pneg %p218
        %s305 = sand.u32 %s208, 1
        %s306 = scalar_lea.sflag [#allocation3], %s305
        %s307 = sand.u32 %s208, 1
        %s308 = smul.addr %s307, 4
        %s309 = scalar_lea.vmem [#allocation2], %s308
        %p310 = scmp.lt.s32.totalorder %s22, 1
        %s311 = scalar_select %p310, %s22, 1
        %s312 = smul.addr %s311, 4
        %s313 = scalar_lea.vmem %s0, %s312
        %p314 = scmp.lt.s32.totalorder %s22, 1
        %s315 = scalar_select %p314, %s22, 1
        %s316 = smul.addr %s315, 4
        %s317 = scalar_lea.vmem %s1, %s316
        %v318 = vld [vmem:[%s313] sm:$0xf]
        %v319 = vld [vmem:[%s317] sm:$0xf]
        %v320 = vld [vmem:[%s2] sm:$0xf]
        %v321 = vld [vmem:[%s3] sm:$0xf]
        %323 = vset.pattern.permute.xlu0 0
        %324 = vperm.xlu0 %323, %v321
        %v325 = vpop.permute.xlu0 %324
        %vm327 = vcmask 31744
        %v329 = vsel %vm327, %v320, 0
        %vm331 = vcmask 1043456
        %v333 = vsel %vm331, %v318, 0
        %335 = vmatprep.subr.mxu0 0.0
        %336 = vmatpush1.msra.mxu0 %v333
        %337 = vmatprep.subr.mxu0 0.0
        %338 = vmatpush1.msra.mxu0 0.0
        %339 = vmatprep.subr.mxu0 0.0
        %340 = vmatpush1.msra.mxu0 0.0
        %341 = vmatprep.subr.mxu0 0.0
        %342 = vmatpush1.msra.mxu0 0.0
        %343 = vmatprep.subr.mxu0 0.0
        %344 = vmatpush1.msra.mxu0 0.0
        %345 = vmatprep.subr.mxu0 0.0
        %346 = vmatpush1.msra.mxu0 0.0
        %347 = vmatprep.subr.mxu0 0.0
        %348 = vmatpush1.msra.mxu0 0.0
        %349 = vmatprep.subr.mxu0 0.0
        %350 = vmatpush1.msra.mxu0 0.0
        %351 = vmatprep.subr.mxu0 0.0
        %352 = vmatpush1.msra.mxu0 0.0
        %353 = vmatprep.subr.mxu0 0.0
        %354 = vmatpush1.msra.mxu0 0.0
        %355 = vmatprep.subr.mxu0 0.0
        %356 = vmatpush1.msra.mxu0 0.0
        %357 = vmatprep.subr.mxu0 0.0
        %358 = vmatpush1.msra.mxu0 0.0
        %359 = vmatprep.subr.mxu0 0.0
        %360 = vmatpush1.msra.mxu0 0.0
        %361 = vmatprep.subr.mxu0 0.0
        %362 = vmatpush1.msra.mxu0 0.0
        %363 = vmatprep.subr.mxu0 0.0
        %364 = vmatpush1.msra.mxu0 0.0
        %365 = vmatprep.subr.mxu0 0.0
        %366 = vmatpush1.msra.mxu0 0.0
        %367 = vmatprep.subr.mxu0 0.0
        %368 = vmatpush1.msra.mxu0 0.0
        %369 = vmatprep.subr.mxu0 0.0
        %370 = vmatpush1.msra.mxu0 0.0
        %371 = vmatprep.subr.mxu0 0.0
        %372 = vmatpush1.msra.mxu0 0.0
        %373 = vmatprep.subr.mxu0 0.0
        %374 = vmatpush1.msra.mxu0 0.0
        %375 = vmatprep.subr.mxu0 0.0
        %376 = vmatpush1.msra.mxu0 0.0
        %377 = vmatprep.subr.mxu0 0.0
        %378 = vmatpush1.msra.mxu0 0.0
        %379 = vmatprep.subr.mxu0 0.0
        %380 = vmatpush1.msra.mxu0 0.0
        %381 = vmatprep.subr.mxu0 0.0
        %382 = vmatpush1.msra.mxu0 0.0
        %383 = vmatprep.subr.mxu0 0.0
        %384 = vmatpush1.msra.mxu0 0.0
        %385 = vmatprep.subr.mxu0 0.0
        %386 = vmatpush1.msra.mxu0 0.0
        %387 = vmatprep.subr.mxu0 0.0
        %388 = vmatpush1.msra.mxu0 0.0
        %389 = vmatprep.subr.mxu0 0.0
        %390 = vmatpush1.msra.mxu0 0.0
        %391 = vmatprep.subr.mxu0 0.0
        %392 = vmatpush1.msra.mxu0 0.0
        %393 = vmatprep.subr.mxu0 0.0
        %394 = vmatpush1.msra.mxu0 0.0
        %395 = vmatprep.subr.mxu0 0.0
        %396 = vmatpush1.msra.mxu0 0.0
        %397 = vmatprep.subr.mxu0 0.0
        %398 = vmatpush1.msra.mxu0 0.0
        %399 = vmatprep.mubr.f32.mxu0 0.0
        %400 = vmatmul.mubr.f32.gmra.mrb[0].mxu0 %v329
        %v401 = vpop.f32.mrb[0].mxu0
        %v402 = vadd.f32 %v325, %v401
        %v403 = vpop.f32.mrb[0].mxu0
        %404 = vdwg.mxu0
        %v405 = vld [vmem:[%s4] sm:$0x3]
        %v406 = vld [vmem:[%s5] sm:$0x3]
        %408 = vset.pattern.permute.xlu0 0
        %409 = vperm.xlu0 %408, %v406
        %v410 = vpop.permute.xlu0 %409
        %v413 = vsel %vm327, %v405, 0
        %v416 = vsel %vm331, %v319, 0
        %418 = vmatprep.subr.mxu0 0.0
        %419 = vmatpush1.msra.mxu0 %v416
        %420 = vmatprep.subr.mxu0 0.0
        %421 = vmatpush1.msra.mxu0 0.0
        %422 = vmatprep.subr.mxu0 0.0
        %423 = vmatpush1.msra.mxu0 0.0
        %424 = vmatprep.subr.mxu0 0.0
        %425 = vmatpush1.msra.mxu0 0.0
        %426 = vmatprep.subr.mxu0 0.0
        %427 = vmatpush1.msra.mxu0 0.0
        %428 = vmatprep.subr.mxu0 0.0
        %429 = vmatpush1.msra.mxu0 0.0
        %430 = vmatprep.subr.mxu0 0.0
        %431 = vmatpush1.msra.mxu0 0.0
        %432 = vmatprep.subr.mxu0 0.0
        %433 = vmatpush1.msra.mxu0 0.0
        %434 = vmatprep.subr.mxu0 0.0
        %435 = vmatpush1.msra.mxu0 0.0
        %436 = vmatprep.subr.mxu0 0.0
        %437 = vmatpush1.msra.mxu0 0.0
        %438 = vmatprep.subr.mxu0 0.0
        %439 = vmatpush1.msra.mxu0 0.0
        %440 = vmatprep.subr.mxu0 0.0
        %441 = vmatpush1.msra.mxu0 0.0
        %442 = vmatprep.subr.mxu0 0.0
        %443 = vmatpush1.msra.mxu0 0.0
        %444 = vmatprep.subr.mxu0 0.0
        %445 = vmatpush1.msra.mxu0 0.0
        %446 = vmatprep.subr.mxu0 0.0
        %447 = vmatpush1.msra.mxu0 0.0
        %448 = vmatprep.subr.mxu0 0.0
        %449 = vmatpush1.msra.mxu0 0.0
        %450 = vmatprep.subr.mxu0 0.0
        %451 = vmatpush1.msra.mxu0 0.0
        %452 = vmatprep.subr.mxu0 0.0
        %453 = vmatpush1.msra.mxu0 0.0
        %454 = vmatprep.subr.mxu0 0.0
        %455 = vmatpush1.msra.mxu0 0.0
        %456 = vmatprep.subr.mxu0 0.0
        %457 = vmatpush1.msra.mxu0 0.0
        %458 = vmatprep.subr.mxu0 0.0
        %459 = vmatpush1.msra.mxu0 0.0
        %460 = vmatprep.subr.mxu0 0.0
        %461 = vmatpush1.msra.mxu0 0.0
        %462 = vmatprep.subr.mxu0 0.0
        %463 = vmatpush1.msra.mxu0 0.0
        %464 = vmatprep.subr.mxu0 0.0
        %465 = vmatpush1.msra.mxu0 0.0
        %466 = vmatprep.subr.mxu0 0.0
        %467 = vmatpush1.msra.mxu0 0.0
        %468 = vmatprep.subr.mxu0 0.0
        %469 = vmatpush1.msra.mxu0 0.0
        %470 = vmatprep.subr.mxu0 0.0
        %471 = vmatpush1.msra.mxu0 0.0
        %472 = vmatprep.subr.mxu0 0.0
        %473 = vmatpush1.msra.mxu0 0.0
        %474 = vmatprep.subr.mxu0 0.0
        %475 = vmatpush1.msra.mxu0 0.0
        %476 = vmatprep.subr.mxu0 0.0
        %477 = vmatpush1.msra.mxu0 0.0
        %478 = vmatprep.subr.mxu0 0.0
        %479 = vmatpush1.msra.mxu0 0.0
        %480 = vmatprep.subr.mxu0 0.0
        %481 = vmatpush1.msra.mxu0 0.0
        %482 = vmatprep.mubr.f32.mxu0 0.0
        %483 = vmatmul.mubr.f32.gmra.mrb[0].mxu0 %v413
        %v484 = vpop.f32.mrb[0].mxu0
        %v485 = vadd.f32 %v410, %v484
        %v486 = vpop.f32.mrb[0].mxu0
        %487 = vdwg.mxu0
        %v489 = vrot.slane %v402, 2
        %491 = vxpose.xlu0.b32.start [1/16] %v489, 128
        %492 = vxpose.xlu0.b32.cont [2/16] 0.0, 128
        %493 = vxpose.xlu0.b32.cont [3/16] 0.0, 128
        %494 = vxpose.xlu0.b32.cont [4/16] 0.0, 128
        %495 = vxpose.xlu0.b32.cont [5/16] 0.0, 128
        %496 = vxpose.xlu0.b32.cont [6/16] 0.0, 128
        %497 = vxpose.xlu0.b32.cont [7/16] 0.0, 128
        %498 = vxpose.xlu0.b32.cont [8/16] 0.0, 128
        %499 = vxpose.xlu0.b32.cont [9/16] 0.0, 128
        %500 = vxpose.xlu0.b32.cont [10/16] 0.0, 128
        %501 = vxpose.xlu0.b32.cont [11/16] 0.0, 128
        %502 = vxpose.xlu0.b32.cont [12/16] 0.0, 128
        %503 = vxpose.xlu0.b32.cont [13/16] 0.0, 128
        %504 = vxpose.xlu0.b32.cont [14/16] 0.0, 128
        %505 = vxpose.xlu0.b32.cont [15/16] 0.0, 128
        %506 = vxpose.xlu0.b32.end [16/16] 0.0, 128
        %v507 = vpop.trf.xlu0
        %v508 = vpop.trf.xlu0
        %v509 = vpop.trf.xlu0
        %v510 = vpop.trf.xlu0
        %v511 = vpop.trf.xlu0
        %v512 = vpop.trf.xlu0
        %v513 = vpop.trf.xlu0
        %v514 = vpop.trf.xlu0
        %v515 = vpop.trf.xlu0
        %v516 = vpop.trf.xlu0
        %v517 = vpop.trf.xlu0
        %v518 = vpop.trf.xlu0
        %v519 = vpop.trf.xlu0
        %v520 = vpop.trf.xlu0
        %v521 = vpop.trf.xlu0
        %v522 = vpop.trf.xlu0
        %vm523 = vcmask 15360
        %v525 = vsel %vm523, %v507, 0
        %v528 = vsel %vm523, %v508, 0
        %v531 = vsel %vm523, %v509, 0
        %v534 = vsel %vm523, %v510, 0
        %v537 = vsel %vm523, %v511, 0
        %v540 = vsel %vm523, %v512, 0
        %v543 = vsel %vm523, %v513, 0
        %v546 = vsel %vm523, %v514, 0
        %vm548 = vcmask 1041408
        %v549 = vsel %vm548, %v402, 0
        %551 = vmatprep.subr.mxu0 0.0
        %552 = vmatpush1.msra.mxu0 %v549
        %553 = vmatprep.subr.mxu0 0.0
        %554 = vmatpush1.msra.mxu0 0.0
        %555 = vmatprep.subr.mxu0 0.0
        %556 = vmatpush1.msra.mxu0 0.0
        %557 = vmatprep.subr.mxu0 0.0
        %558 = vmatpush1.msra.mxu0 0.0
        %559 = vmatprep.subr.mxu0 0.0
        %560 = vmatpush1.msra.mxu0 0.0
        %561 = vmatprep.subr.mxu0 0.0
        %562 = vmatpush1.msra.mxu0 0.0
        %563 = vmatprep.subr.mxu0 0.0
        %564 = vmatpush1.msra.mxu0 0.0
        %565 = vmatprep.subr.mxu0 0.0
        %566 = vmatpush1.msra.mxu0 0.0
        %567 = vmatprep.subr.mxu0 0.0
        %568 = vmatpush1.msra.mxu0 0.0
        %569 = vmatprep.subr.mxu0 0.0
        %570 = vmatpush1.msra.mxu0 0.0
        %571 = vmatprep.subr.mxu0 0.0
        %572 = vmatpush1.msra.mxu0 0.0
        %573 = vmatprep.subr.mxu0 0.0
        %574 = vmatpush1.msra.mxu0 0.0
        %575 = vmatprep.subr.mxu0 0.0
        %576 = vmatpush1.msra.mxu0 0.0
        %577 = vmatprep.subr.mxu0 0.0
        %578 = vmatpush1.msra.mxu0 0.0
        %579 = vmatprep.subr.mxu0 0.0
        %580 = vmatpush1.msra.mxu0 0.0
        %581 = vmatprep.subr.mxu0 0.0
        %582 = vmatpush1.msra.mxu0 0.0
        %583 = vmatprep.subr.mxu0 0.0
        %584 = vmatpush1.msra.mxu0 0.0
        %585 = vmatprep.subr.mxu0 0.0
        %586 = vmatpush1.msra.mxu0 0.0
        %587 = vmatprep.subr.mxu0 0.0
        %588 = vmatpush1.msra.mxu0 0.0
        %589 = vmatprep.subr.mxu0 0.0
        %590 = vmatpush1.msra.mxu0 0.0
        %591 = vmatprep.subr.mxu0 0.0
        %592 = vmatpush1.msra.mxu0 0.0
        %593 = vmatprep.subr.mxu0 0.0
        %594 = vmatpush1.msra.mxu0 0.0
        %595 = vmatprep.subr.mxu0 0.0
        %596 = vmatpush1.msra.mxu0 0.0
        %597 = vmatprep.subr.mxu0 0.0
        %598 = vmatpush1.msra.mxu0 0.0
        %599 = vmatprep.subr.mxu0 0.0
        %600 = vmatpush1.msra.mxu0 0.0
        %601 = vmatprep.subr.mxu0 0.0
        %602 = vmatpush1.msra.mxu0 0.0
        %603 = vmatprep.subr.mxu0 0.0
        %604 = vmatpush1.msra.mxu0 0.0
        %605 = vmatprep.subr.mxu0 0.0
        %606 = vmatpush1.msra.mxu0 0.0
        %607 = vmatprep.subr.mxu0 0.0
        %608 = vmatpush1.msra.mxu0 0.0
        %609 = vmatprep.subr.mxu0 0.0
        %610 = vmatpush1.msra.mxu0 0.0
        %611 = vmatprep.subr.mxu0 0.0
        %612 = vmatpush1.msra.mxu0 0.0
        %613 = vmatprep.subr.mxu0 0.0
        %614 = vmatpush1.msra.mxu0 0.0
        %615 = vmatprep.mubr.f32.mxu0 0.0
        %616 = vmatmul.mubr.f32.gmra.mrb[0].mxu0 %v525
        %v617 = vpop.f32.mrb[0].mxu0
        %v618 = vadd.f32 0.0, %v617
        %v619 = vpop.f32.mrb[0].mxu0
        %620 = vmatprep.mubr.f32.mxu0 0.0
        %621 = vmatmul.mubr.f32.gmra.mrb[0].mxu0 %v528
        %v622 = vpop.f32.mrb[0].mxu0
        %v623 = vadd.f32 0.0, %v622
        %v624 = vpop.f32.mrb[0].mxu0
        %625 = vmatprep.mubr.f32.mxu0 0.0
        %626 = vmatmul.mubr.f32.gmra.mrb[0].mxu0 %v531
        %v627 = vpop.f32.mrb[0].mxu0
        %v628 = vadd.f32 0.0, %v627
        %v629 = vpop.f32.mrb[0].mxu0
        %630 = vmatprep.mubr.f32.mxu0 0.0
        %631 = vmatmul.mubr.f32.gmra.mrb[0].mxu0 %v534
        %v632 = vpop.f32.mrb[0].mxu0
        %v633 = vadd.f32 0.0, %v632
        %v634 = vpop.f32.mrb[0].mxu0
        %635 = vmatprep.mubr.f32.mxu0 0.0
        %636 = vmatmul.mubr.f32.gmra.mrb[0].mxu0 %v537
        %v637 = vpop.f32.mrb[0].mxu0
        %v638 = vadd.f32 0.0, %v637
        %v639 = vpop.f32.mrb[0].mxu0
        %640 = vmatprep.mubr.f32.mxu0 0.0
        %641 = vmatmul.mubr.f32.gmra.mrb[0].mxu0 %v540
        %v642 = vpop.f32.mrb[0].mxu0
        %v643 = vadd.f32 0.0, %v642
        %v644 = vpop.f32.mrb[0].mxu0
        %645 = vmatprep.mubr.f32.mxu0 0.0
        %646 = vmatmul.mubr.f32.gmra.mrb[0].mxu0 %v543
        %v647 = vpop.f32.mrb[0].mxu0
        %v648 = vadd.f32 0.0, %v647
        %v649 = vpop.f32.mrb[0].mxu0
        %650 = vmatprep.mubr.f32.mxu0 0.0
        %651 = vmatmul.mubr.f32.gmra.mrb[0].mxu0 %v546
        %v652 = vpop.f32.mrb[0].mxu0
        %v653 = vadd.f32 0.0, %v652
        %v654 = vpop.f32.mrb[0].mxu0
        %655 = vdwg.mxu0
        %vm656 = vcmask 523264
        %v657 = vsel %vm656, %v618, -inf
        %v658 = vsel %vm656, %v623, -inf
        %v659 = vsel %vm656, %v628, -inf
        %v660 = vsel %vm656, %v633, -inf
        %v661 = vsel %vm656, %v638, -inf
        %v662 = vmax.f32 %v657, %v661
        %v663 = vsel %vm656, %v643, -inf
        %v664 = vmax.f32 %v658, %v663
        %v665 = vsel %vm656, %v648, -inf
        %v666 = vmax.f32 %v659, %v665
        %v667 = vsel %vm656, %v653, -inf
        %v668 = vmax.f32 %v660, %v667
        %v669 = vmax.f32 %v662, %v664
        %v670 = vmax.f32 %v666, %v668
        %v671 = vmax.f32 %v669, %v670
        %v672 = vrot.slane %v671, 4
        %v673 = vmax.f32 %v671, %v672
        %v674 = vrot.slane %v673, 2
        %v675 = vmax.f32 %v673, %v674
        %v676 = vrot.slane %v675, 1
        %v677 = vmax.f32 %v675, %v676
        %v678 = vsub.f32 %v618, %v677
        %v679 = vsub.f32 %v623, %v677
        %v680 = vsub.f32 %v628, %v677
        %v681 = vsub.f32 %v633, %v677
        %v682 = vsub.f32 %v638, %v677
        %v683 = vsub.f32 %v643, %v677
        %v684 = vsub.f32 %v648, %v677
        %v685 = vsub.f32 %v653, %v677
        %v686 = vmul.f32 %v678, 1.442695
        %v687 = vpow.pop %v686
        %v688 = vmul.f32 %v679, 1.442695
        %v689 = vpow.pop %v688
        %v690 = vmul.f32 %v680, 1.442695
        %v691 = vpow.pop %v690
        %v692 = vmul.f32 %v681, 1.442695
        %v693 = vpow.pop %v692
        %v694 = vmul.f32 %v682, 1.442695
        %v695 = vpow.pop %v694
        %v696 = vmul.f32 %v683, 1.442695
        %v697 = vpow.pop %v696
        %v698 = vmul.f32 %v684, 1.442695
        %v699 = vpow.pop %v698
        %v700 = vmul.f32 %v685, 1.442695
        %v701 = vpow.pop %v700
        %v702 = vsel %vm656, %v687, 0.0
        %v703 = vsel %vm656, %v689, 0.0
        %v704 = vadd.f32 %v702, %v703
        %v705 = vsel %vm656, %v691, 0.0
        %v706 = vadd.f32 %v704, %v705
        %v707 = vsel %vm656, %v693, 0.0
        %v708 = vadd.f32 %v706, %v707
        %v709 = vsel %vm656, %v695, 0.0
        %v710 = vadd.f32 %v708, %v709
        %v711 = vsel %vm656, %v697, 0.0
        %v712 = vadd.f32 %v710, %v711
        %v713 = vsel %vm656, %v699, 0.0
        %v714 = vadd.f32 %v712, %v713
        %v715 = vsel %vm656, %v701, 0.0
        %v716 = vadd.f32 %v714, %v715
        %v717 = vrot.slane %v716, 4
        %v718 = vadd.f32 %v716, %v717
        %v719 = vrot.slane %v718, 2
        %v720 = vadd.f32 %v718, %v719
        %v721 = vrot.slane %v720, 1
        %v722 = vadd.f32 %v720, %v721
        %v723 = vrcp.pop %v722
        %v724 = vmul.f32 %v687, %v723
        %v725 = vmul.f32 %v689, %v723
        %v726 = vmul.f32 %v691, %v723
        %v727 = vmul.f32 %v693, %v723
        %v728 = vmul.f32 %v695, %v723
        %v729 = vmul.f32 %v697, %v723
        %v730 = vmul.f32 %v699, %v723
        %v731 = vmul.f32 %v701, %v723
        %v733 = vsel %vm656, %v485, 0
        %735 = vmatprep.subr.mxu0 0.0
        %736 = vmatpush1.msra.mxu0 %v724
        %737 = vmatprep.subr.mxu0 0.0
        %738 = vmatpush1.msra.mxu0 %v725
        %739 = vmatprep.subr.mxu0 0.0
        %740 = vmatpush1.msra.mxu0 %v726
        %741 = vmatprep.subr.mxu0 0.0
        %742 = vmatpush1.msra.mxu0 %v727
        %743 = vmatprep.subr.mxu0 0.0
        %744 = vmatpush1.msra.mxu0 %v728
        %745 = vmatprep.subr.mxu0 0.0
        %746 = vmatpush1.msra.mxu0 %v729
        %747 = vmatprep.subr.mxu0 0.0
        %748 = vmatpush1.msra.mxu0 %v730
        %749 = vmatprep.subr.mxu0 0.0
        %750 = vmatpush1.msra.mxu0 %v731
        %751 = vmatprep.subr.mxu0 0.0
        %752 = vmatpush1.msra.mxu0 0.0
        %753 = vmatprep.subr.mxu0 0.0
        %754 = vmatpush1.msra.mxu0 0.0
        %755 = vmatprep.subr.mxu0 0.0
        %756 = vmatpush1.msra.mxu0 0.0
        %757 = vmatprep.subr.mxu0 0.0
        %758 = vmatpush1.msra.mxu0 0.0
        %759 = vmatprep.subr.mxu0 0.0
        %760 = vmatpush1.msra.mxu0 0.0
        %761 = vmatprep.subr.mxu0 0.0
        %762 = vmatpush1.msra.mxu0 0.0
        %763 = vmatprep.subr.mxu0 0.0
        %764 = vmatpush1.msra.mxu0 0.0
        %765 = vmatprep.subr.mxu0 0.0
        %766 = vmatpush1.msra.mxu0 0.0
        %767 = vmatprep.subr.mxu0 0.0
        %768 = vmatpush1.msra.mxu0 0.0
        %769 = vmatprep.subr.mxu0 0.0
        %770 = vmatpush1.msra.mxu0 0.0
        %771 = vmatprep.subr.mxu0 0.0
        %772 = vmatpush1.msra.mxu0 0.0
        %773 = vmatprep.subr.mxu0 0.0
        %774 = vmatpush1.msra.mxu0 0.0
        %775 = vmatprep.subr.mxu0 0.0
        %776 = vmatpush1.msra.mxu0 0.0
        %777 = vmatprep.subr.mxu0 0.0
        %778 = vmatpush1.msra.mxu0 0.0
        %779 = vmatprep.subr.mxu0 0.0
        %780 = vmatpush1.msra.mxu0 0.0
        %781 = vmatprep.subr.mxu0 0.0
        %782 = vmatpush1.msra.mxu0 0.0
        %783 = vmatprep.subr.mxu0 0.0
        %784 = vmatpush1.msra.mxu0 0.0
        %785 = vmatprep.subr.mxu0 0.0
        %786 = vmatpush1.msra.mxu0 0.0
        %787 = vmatprep.subr.mxu0 0.0
        %788 = vmatpush1.msra.mxu0 0.0
        %789 = vmatprep.subr.mxu0 0.0
        %790 = vmatpush1.msra.mxu0 0.0
        %791 = vmatprep.subr.mxu0 0.0
        %792 = vmatpush1.msra.mxu0 0.0
        %793 = vmatprep.subr.mxu0 0.0
        %794 = vmatpush1.msra.mxu0 0.0
        %795 = vmatprep.subr.mxu0 0.0
        %796 = vmatpush1.msra.mxu0 0.0
        %797 = vmatprep.subr.mxu0 0.0
        %798 = vmatpush1.msra.mxu0 0.0
        %799 = vmatprep.mubr.f32.mxu0 0.0
        %800 = vmatmul.mubr.f32.gmra.mrb[0].mxu0 %v733
        %v801 = vpop.f32.mrb[0].mxu0
        %v802 = vadd.f32 0.0, %v801
        %v803 = vpop.f32.mrb[0].mxu0
        %804 = vdwg.mxu0
        %v805 = vld [vmem:[%s6] sm:$0xf]
        %v806 = vld [vmem:[%s7] sm:$0xf]
        %808 = vset.pattern.permute.xlu0 0
        %809 = vperm.xlu0 %808, %v806
        %v810 = vpop.permute.xlu0 %809
        %v813 = vsel %vm523, %v805, 0
        %v816 = vsel %vm548, %v802, 0
        %818 = vmatprep.subr.mxu0 0.0
        %819 = vmatpush1.msra.mxu0 %v816
        %820 = vmatprep.subr.mxu0 0.0
        %821 = vmatpush1.msra.mxu0 0.0
        %822 = vmatprep.subr.mxu0 0.0
        %823 = vmatpush1.msra.mxu0 0.0
        %824 = vmatprep.subr.mxu0 0.0
        %825 = vmatpush1.msra.mxu0 0.0
        %826 = vmatprep.subr.mxu0 0.0
        %827 = vmatpush1.msra.mxu0 0.0
        %828 = vmatprep.subr.mxu0 0.0
        %829 = vmatpush1.msra.mxu0 0.0
        %830 = vmatprep.subr.mxu0 0.0
        %831 = vmatpush1.msra.mxu0 0.0
        %832 = vmatprep.subr.mxu0 0.0
        %833 = vmatpush1.msra.mxu0 0.0
        %834 = vmatprep.subr.mxu0 0.0
        %835 = vmatpush1.msra.mxu0 0.0
        %836 = vmatprep.subr.mxu0 0.0
        %837 = vmatpush1.msra.mxu0 0.0
        %838 = vmatprep.subr.mxu0 0.0
        %839 = vmatpush1.msra.mxu0 0.0
        %840 = vmatprep.subr.mxu0 0.0
        %841 = vmatpush1.msra.mxu0 0.0
        %842 = vmatprep.subr.mxu0 0.0
        %843 = vmatpush1.msra.mxu0 0.0
        %844 = vmatprep.subr.mxu0 0.0
        %845 = vmatpush1.msra.mxu0 0.0
        %846 = vmatprep.subr.mxu0 0.0
        %847 = vmatpush1.msra.mxu0 0.0
        %848 = vmatprep.subr.mxu0 0.0
        %849 = vmatpush1.msra.mxu0 0.0
        %850 = vmatprep.subr.mxu0 0.0
        %851 = vmatpush1.msra.mxu0 0.0
        %852 = vmatprep.subr.mxu0 0.0
        %853 = vmatpush1.msra.mxu0 0.0
        %854 = vmatprep.subr.mxu0 0.0
        %855 = vmatpush1.msra.mxu0 0.0
        %856 = vmatprep.subr.mxu0 0.0
        %857 = vmatpush1.msra.mxu0 0.0
        %858 = vmatprep.subr.mxu0 0.0
        %859 = vmatpush1.msra.mxu0 0.0
        %860 = vmatprep.subr.mxu0 0.0
        %861 = vmatpush1.msra.mxu0 0.0
        %862 = vmatprep.subr.mxu0 0.0
        %863 = vmatpush1.msra.mxu0 0.0
        %864 = vmatprep.subr.mxu0 0.0
        %865 = vmatpush1.msra.mxu0 0.0
        %866 = vmatprep.subr.mxu0 0.0
        %867 = vmatpush1.msra.mxu0 0.0
        %868 = vmatprep.subr.mxu0 0.0
        %869 = vmatpush1.msra.mxu0 0.0
        %870 = vmatprep.subr.mxu0 0.0
        %871 = vmatpush1.msra.mxu0 0.0
        %872 = vmatprep.subr.mxu0 0.0
        %873 = vmatpush1.msra.mxu0 0.0
        %874 = vmatprep.subr.mxu0 0.0
        %875 = vmatpush1.msra.mxu0 0.0
        %876 = vmatprep.subr.mxu0 0.0
        %877 = vmatpush1.msra.mxu0 0.0
        %878 = vmatprep.subr.mxu0 0.0
        %879 = vmatpush1.msra.mxu0 0.0
        %880 = vmatprep.subr.mxu0 0.0
        %881 = vmatpush1.msra.mxu0 0.0
        %882 = vmatprep.mubr.f32.mxu0 0.0
        %883 = vmatmul.mubr.f32.gmra.mrb[0].mxu0 %v813
        %v884 = vpop.f32.mrb[0].mxu0
        %v885 = vadd.f32 %v810, %v884
        %v886 = vpop.f32.mrb[0].mxu0
        %887 = vdwg.mxu0
        %vm888 = vcmask 519168
        %889 = vst.msk [vmem:[%s309] sm:$0xf] %vm888, %v885
        %s890 = sand.u32 %s208, 1
        %s891 = scalar_lea.sflag [#allocation3], %s890
        %s892 = sand.u32 %s208, 1
        %s893 = smul.addr %s892, 4
        %s894 = scalar_lea.vmem [#allocation2], %s893
        // Predicated region
        $region53: #{tpu_custom_call.1} parent=51 // pred_check
          %p895 = pneg %p218
        $region54: #{tpu_custom_call.1} parent=51 // pred_check_branch
          %897 = sbr.rel (%p895) target = $region56
        $region55: #{tpu_custom_call.1} parent=51 // pred_region
          %s899 = ssub.s32 64, 64
          %900 = vsyncadd %s891, %s899
          %s901 = smul.addr %s22, 64
          %s902 = scalar_lea.hbm %s8, %s901
          %s904 = sshll.u32 %s894, 4
          %s905 = int_to_ptr.vmem [resolvable:$true] %s904
          %907 = dma.vmem_to_hbm [thread:$0]  %s905, 64, %s902, %s891
        $region56: #{tpu_custom_call.1} parent=51 // pred_fallthru
          _
      $region52: #{tpu_custom_call.1} parent=5 // pred_fallthru
        _
      %p908 = scmp.le.s32.totalorder 2, %s17
      // Predicated region
      $region57: #{tpu_custom_call.1} parent=5 // pred_check
        %p909 = pneg %p908
      $region58: #{tpu_custom_call.1} parent=5 // pred_check_branch
        %911 = sbr.rel (%p909) target = $region60
      $region59: #{tpu_custom_call.1} parent=5 // pred_region
        %s912 = ssub.s32 %s17, 2
        // Predicated region
        $region61: #{tpu_custom_call.1} parent=59 // pred_check
          %p913 = pneg %p224
        $region62: #{tpu_custom_call.1} parent=59 // pred_check_branch
          %915 = sbr.rel (%p913) target = $region64
        $region63: #{tpu_custom_call.1} parent=59 // pred_region
          %s916 = sand.u32 %s209, 1
          %s917 = scalar_lea.sflag [#allocation3], %s916
          %s918 = sand.u32 %s209, 1
          %s919 = smul.addr %s918, 4
          %s920 = scalar_lea.vmem [#allocation2], %s919
          %921 = dma.done %s917, 64
        $region64: #{tpu_custom_call.1} parent=59 // pred_fallthru
          _
      $region60: #{tpu_custom_call.1} parent=5 // pred_fallthru
        _
    $region6: #{tpu_custom_call.1} parent=1 // loop_footer
      %s21 = sadd.s32 1, %s17
    $region7: #{tpu_custom_call.1} parent=1 // loop_footer_branch
      %16 = sbr.rel target = $region3
    $region8: #{tpu_custom_call.1} parent=1 // loop_exit
      _
    %922 = vsyncpa [#allocation3], 1
    %s923 = scalar_lea.sflag [#allocation3], 1
    %924 = vsyncpa %s923, 1

</llo_original>
